<compile_context>
chip_gen: v7x
topology: tpu7x:2x2x1
jax: 0.10.0
libtpu: 0.0.40
codegen_flags: <defaults>
</compile_context>

<pallas_src>
import math

import jax
import jax.numpy as jnp
from jax.experimental import pallas as pl
from jax.experimental.pallas import tpu as pltpu

_INV_SQRT2 = 1.0 / math.sqrt(2.0)


def _gelu_inverse(target):
    """Unique positive root of 0.5*t*(1+erf(t/sqrt(2))) = target (target>0)."""
    lo, hi = 0.0, 8.0
    for _ in range(200):
        mid = 0.5 * (lo + hi)
        if 0.5 * mid * (1.0 + math.erf(mid * _INV_SQRT2)) < target:
            lo = mid
        else:
            hi = mid
    return 0.5 * (lo + hi)


# GELU(s) <= 0.7  <=>  s <= _GELU_THRESH  (GELU<=0<0.7 for s<=0, strictly
# increasing for s>0).
_GELU_THRESH = _gelu_inverse(0.7)  # ~0.86731


def _occlusion_kernel(scale_ref, const_ref, x_ref, out_ref):
    # scale_ref: SMEM (C,) f32    const_ref: SMEM (1,) f32
    # x_ref:     VMEM (1, C, Dt, H*W)  native dtype
    # out_ref:   VMEM (1, Dt, H*W) int8 elementwise mask (1 = True)
    C = x_ref.shape[1]
    acc = jnp.full(x_ref.shape[2:], const_ref[0], dtype=jnp.float32)  # (Dt, HW)

    if C <= 8:
        # Tiny channel count: cheap static unroll of the folded BN+sum.
        for c in range(C):
            acc = acc + scale_ref[c] * x_ref[0, c].astype(jnp.float32)
    else:
        # Larger C: keep the loop visible to the compiler, partial unroll.
        def body(c, a):
            return a + scale_ref[c] * x_ref[0, c].astype(jnp.float32)

        acc = jax.lax.fori_loop(0, C, body, acc, unroll=8)

    # GELU threshold inversion: single compare instead of erf + mults.
    out_ref[0] = (acc <= jnp.float32(_GELU_THRESH)).astype(jnp.int8)


def _pick_d_tile(C, D, HW, itemsize, block_budget_bytes=2 * 1024 * 1024):
    """Largest D tile whose input block stays under the VMEM budget."""
    bytes_per_d = max(1, C * HW * itemsize)
    dt = block_budget_bytes // bytes_per_d
    if dt >= D:
        return D
    # Multiple of 32 keeps both f32 (8) and int8 (32) sublane tiling happy.
    dt = max(8, (dt // 32) * 32) if dt >= 32 else 8
    return min(dt, D)


def occlusion_mask(x, gamma, beta, running_mean, running_var, eps=1e-5):
    """x: [N, C, D, H, W] float -> bool mask [N, D, H]."""
    N, C, D, H, W = x.shape
    HW = H * W

    # Free, contiguous collapse: put H*W on the lane axis.
    x_flat = x.reshape(N, C, D, HW)

    scale = (gamma / jnp.sqrt(running_var + eps)).astype(jnp.float32)      # (C,)
    const = jnp.sum(beta.astype(jnp.float32)
                    - running_mean.astype(jnp.float32) * scale).reshape((1,))

    itemsize = jnp.dtype(x.dtype).itemsize
    dt = _pick_d_tile(C, D, HW, itemsize)
    grid = (N, pl.cdiv(D, dt))

    out_i8 = pl.pallas_call(
        _occlusion_kernel,
        out_shape=jax.ShapeDtypeStruct((N, D, HW), jnp.int8),
        grid_spec=pltpu.PrefetchScalarGridSpec(
            num_scalar_prefetch=0,
            grid=grid,
            in_specs=[
                pl.BlockSpec(memory_space=pltpu.SMEM),                    # scale (C,)
                pl.BlockSpec(memory_space=pltpu.SMEM),                    # const (1,)
                pl.BlockSpec((1, C, dt, HW), lambda n, d: (n, 0, d, 0)),  # x
            ],
            out_specs=pl.BlockSpec((1, dt, HW), lambda n, d: (n, d, 0)),
        ),
        compiler_params=pltpu.CompilerParams(
            dimension_semantics=("parallel", "parallel"),
            vmem_limit_bytes=32 * 1024 * 1024,
        ),
    )(scale, const, x_flat)

    # any-over-W on the (much smaller) int8 mask in plain XLA.
    return jnp.any(out_i8.reshape(N, D, H, W) != 0, axis=-1)


def _reference(x, gamma, beta, running_mean, running_var, eps=1e-5):
    g = gamma[None, :, None, None, None]
    b = beta[None, :, None, None, None]
    m = running_mean[None, :, None, None, None]
    v = running_var[None, :, None, None, None]
    y = (x - m) / jnp.sqrt(v + eps) * g + b
    s = jnp.sum(y, axis=1)
    gel = 0.5 * s * (1.0 + jax.lax.erf(s * _INV_SQRT2))
    return jnp.any(gel <= 0.7, axis=-1)


if __name__ == "__main__":
    # Small shapes consistent with the module: N=2, C=4, D=8, H=16, W=16.
    N, C, D, H, W = 2, 4, 8, 16, 16
    key = jax.random.PRNGKey(0)
    x = jax.random.normal(key, (N, C, D, H, W), dtype=jnp.float32)

    # Deterministic synthetic BatchNorm3d parameters (shape = in_channel = C).
    gamma = 1.0 + 0.1 * jnp.arange(C, dtype=jnp.float32)
    beta = 0.01 * jnp.arange(C, dtype=jnp.float32)
    running_mean = 0.05 * jnp.arange(C, dtype=jnp.float32)
    running_var = 1.0 + 0.02 * jnp.arange(C, dtype=jnp.float32)

    out = occlusion_mask(x, gamma, beta, running_mean, running_var)
    out = jax.block_until_ready(out)

    ref = _reference(x, gamma, beta, running_mean, running_var)
    assert out.shape == (N, D, H) and out.dtype == jnp.bool_
    assert bool(jnp.all(out == ref)), "Pallas kernel mismatch vs reference"

    print("KERNEL_OK")
</pallas_src>

<mosaic_0001>
module attributes {stable_mosaic.version = 11 : i64} {
  func.func @_occlusion_kernel(%arg0: i32, %arg1: i32, %arg2: memref<4xf32, #tpu.memory_space<smem>>, %arg3: memref<1xf32, #tpu.memory_space<smem>>, %arg4: memref<1x4x8x256xf32, #tpu.memory_space<vmem>>, %arg5: memref<1x8x256xi8, #tpu.memory_space<vmem>>) attributes {dimension_semantics = [#tpu.dimension_semantics<parallel>, #tpu.dimension_semantics<parallel>], iteration_bounds = array<i64: 2, 1>, scalar_prefetch = 0 : i64, scratch_operands = 0 : i64, tpu.core_type = #tpu.core_type<tc>, window_params = [{transform_indices = @transform_0, window_bounds = array<i64: 4>}, {transform_indices = @transform_1, window_bounds = array<i64: 1>}, {transform_indices = @transform_2, window_bounds = array<i64: 1, 4, 8, 256>}, {transform_indices = @transform_3, window_bounds = array<i64: 1, 8, 256>}]} {
    %c0 = arith.constant 0 : index
    %0 = memref.load %arg3[%c0] : memref<1xf32, #tpu.memory_space<smem>>
    %1 = vector.broadcast %0 : f32 to vector<8x256xf32>
    %c0_0 = arith.constant 0 : index
    %2 = memref.load %arg2[%c0_0] : memref<4xf32, #tpu.memory_space<smem>>
    %c0_1 = arith.constant 0 : index
    %c0_2 = arith.constant 0 : index
    %c0_3 = arith.constant 0 : index
    %c0_4 = arith.constant 0 : index
    %3 = vector.load %arg4[%c0_1, %c0_2, %c0_3, %c0_4] : memref<1x4x8x256xf32, #tpu.memory_space<vmem>>, vector<1x1x8x256xf32>
    %4 = vector.shape_cast %3 : vector<1x1x8x256xf32> to vector<8x256xf32>
    %5 = vector.broadcast %2 : f32 to vector<8x256xf32>
    %6 = arith.mulf %5, %4 : vector<8x256xf32>
    %7 = arith.addf %1, %6 : vector<8x256xf32>
    %c1 = arith.constant 1 : index
    %8 = memref.load %arg2[%c1] : memref<4xf32, #tpu.memory_space<smem>>
    %c0_5 = arith.constant 0 : index
    %c1_6 = arith.constant 1 : index
    %c0_7 = arith.constant 0 : index
    %c0_8 = arith.constant 0 : index
    %9 = vector.load %arg4[%c0_5, %c1_6, %c0_7, %c0_8] : memref<1x4x8x256xf32, #tpu.memory_space<vmem>>, vector<1x1x8x256xf32>
    %10 = vector.shape_cast %9 : vector<1x1x8x256xf32> to vector<8x256xf32>
    %11 = vector.broadcast %8 : f32 to vector<8x256xf32>
    %12 = arith.mulf %11, %10 : vector<8x256xf32>
    %13 = arith.addf %7, %12 : vector<8x256xf32>
    %c2 = arith.constant 2 : index
    %14 = memref.load %arg2[%c2] : memref<4xf32, #tpu.memory_space<smem>>
    %c0_9 = arith.constant 0 : index
    %c2_10 = arith.constant 2 : index
    %c0_11 = arith.constant 0 : index
    %c0_12 = arith.constant 0 : index
    %15 = vector.load %arg4[%c0_9, %c2_10, %c0_11, %c0_12] : memref<1x4x8x256xf32, #tpu.memory_space<vmem>>, vector<1x1x8x256xf32>
    %16 = vector.shape_cast %15 : vector<1x1x8x256xf32> to vector<8x256xf32>
    %17 = vector.broadcast %14 : f32 to vector<8x256xf32>
    %18 = arith.mulf %17, %16 : vector<8x256xf32>
    %19 = arith.addf %13, %18 : vector<8x256xf32>
    %c3 = arith.constant 3 : index
    %20 = memref.load %arg2[%c3] : memref<4xf32, #tpu.memory_space<smem>>
    %c0_13 = arith.constant 0 : index
    %c3_14 = arith.constant 3 : index
    %c0_15 = arith.constant 0 : index
    %c0_16 = arith.constant 0 : index
    %21 = vector.load %arg4[%c0_13, %c3_14, %c0_15, %c0_16] : memref<1x4x8x256xf32, #tpu.memory_space<vmem>>, vector<1x1x8x256xf32>
    %22 = vector.shape_cast %21 : vector<1x1x8x256xf32> to vector<8x256xf32>
    %23 = vector.broadcast %20 : f32 to vector<8x256xf32>
    %24 = arith.mulf %23, %22 : vector<8x256xf32>
    %25 = arith.addf %19, %24 : vector<8x256xf32>
    %cst = arith.constant 0.867292821 : f32
    %26 = vector.broadcast %cst : f32 to vector<8x256xf32>
    %27 = arith.cmpf ole, %25, %26 : vector<8x256xf32>
    %28 = arith.extui %27 : vector<8x256xi1> to vector<8x256xi8>
    %c0_17 = arith.constant 0 : index
    %c0_18 = arith.constant 0 : index
    %c0_19 = arith.constant 0 : index
    %29 = vector.load %arg5[%c0_17, %c0_18, %c0_19] : memref<1x8x256xi8, #tpu.memory_space<vmem>>, vector<1x8x256xi8>
    %30 = vector.shape_cast %29 : vector<1x8x256xi8> to vector<8x256xi8>
    %31 = vector.shape_cast %28 : vector<8x256xi8> to vector<1x8x256xi8>
    tpu.vector_store %arg5[%c0_17, %c0_18, %c0_19], %31 {strides = array<i32>} : memref<1x8x256xi8, #tpu.memory_space<vmem>>, vector<1x8x256xi8>,
    return
  }
  func.func @transform_0(%arg0: i32, %arg1: i32) -> i32 {
    %c0_i32 = arith.constant 0 : i32
    %c0_i32_0 = arith.constant 0 : i32
    return %c0_i32 : i32
  }
  func.func @transform_1(%arg0: i32, %arg1: i32) -> i32 {
    %c0_i32 = arith.constant 0 : i32
    %c0_i32_0 = arith.constant 0 : i32
    return %c0_i32 : i32
  }
  func.func @transform_2(%arg0: i32, %arg1: i32) -> (i32, i32, i32, i32) {
    %c0_i32 = arith.constant 0 : i32
    %c0_i32_0 = arith.constant 0 : i32
    %c0_i32_1 = arith.constant 0 : i32
    return %arg0, %c0_i32, %arg1, %c0_i32_0 : i32, i32, i32, i32
  }
  func.func @transform_3(%arg0: i32, %arg1: i32) -> (i32, i32, i32) {
    %c0_i32 = arith.constant 0 : i32
    %c0_i32_0 = arith.constant 0 : i32
    return %arg0, %arg1, %c0_i32 : i32, i32, i32
  }
}

</mosaic_0001>

<llo_original>
// kernel: tpu_custom_call.1
$region0: #{tpu_custom_call.1}
  #allocation0 [shape = 'u32[]', space=smem, size = 0x4, offset = 0x4, fixed_abs, tag = 'smem constant byte address 0x4 - core index']
  #allocation1 [shape = 'u32[144,128]{1,0:T(1,128)}', space=vmem, size = 0x12000, scoped, tag = 'internal scratch']
  #allocation2 [shape = 'f32[1]{0:T(128)S(6)}', space=smem, size = 0x200, scoped, tag = 'scoped memory for tpu_custom_call.1']
  %s0 = inlined_call_operand.vmem [shape: f32[4], index: 0, kind: input, shape index: {}]
  %s1 = inlined_call_operand.<no memory space> [shape: f32[1], index: 1, kind: input, shape index: {}]
  %s2 = inlined_call_operand.hbm [shape: f32[2,4,8,256], index: 2, kind: input, shape index: {}]
  %s3 = inlined_call_operand.hbm [shape: s8[2,8,256], index: 3, kind: output, shape index: {}]
  %s4 = sld [smem:[#allocation0]]
  $region53: #{tpu_custom_call.1} parent=0
    _
  %s6 = ssub.s32 1, %s4
  %s7 = scalar_select 0, %s6, %s4
  %8 = sst [smem:[#allocation2]] %s1
  $region1: #{tpu_custom_call.1} parent=0
    #allocation3 [shape = 'u8[512]{0}', space=smem, size = 0x200, scoped, tag = 'input window, operand 0, single buffered']
    #allocation4 [shape = 's32[2]{0}', space=sflag, size = 0x8, scoped, tag = 'scoped memory for tpu_custom_call.1']
    #allocation5 [shape = 's32[2]{0}', space=sflag, size = 0x8, scoped, tag = 'scoped memory for tpu_custom_call.1']
    #allocation6 [shape = 's32[2]{0}', space=sflag, size = 0x8, scoped, tag = 'scoped memory for tpu_custom_call.1']
    #allocation7 [shape = 'u8[65536]{0}', space=vmem, size = 0x10000, scoped, tag = 'input window, operand 2']
    #allocation8 [shape = 'u8[4096]{0}', space=vmem, size = 0x1000, scoped, tag = 'output window, operand 0']
    %9 = vsyncpa [#allocation6], 0
    %10 = vsyncpa [#allocation4], 0
    %s11 = scalar_lea.sflag [#allocation4], 1
    %12 = vsyncpa %s11, 0
    %13 = vsyncpa [#allocation5], 0
    %s14 = scalar_lea.sflag [#allocation5], 1
    %15 = vsyncpa %s14, 0
    loop: start=0, step=1, limit=4
    $region2: #{tpu_custom_call.1} parent=1 // loop_pre_header
      _
    $region3: #{tpu_custom_call.1} parent=1 // loop_header
      %s17 = sphi 0, %s21
      %p18 = scmp.ge.s32.totalorder %s17, 4
      %s24 = sphi 0, %s36
      %s25 = sphi 0, %s32
      %s26 = sphi 0, %s24
      %s27 = sphi 0, %s25
      %s28 = sphi 0, %s26
      %s29 = sphi 0, %s27
      %s37 = sphi 0, %s37
      %s39 = sphi 0, %s37
      %s40 = sphi 0, %s39
      %s54 = sphi 0, %s40
      %s58 = sphi 0, %s58
      %s60 = sphi 0, %s58
      %s61 = sphi 0, %s60
      %s75 = sphi 0, %s61
      %s83 = sphi 0, %s85
      %s86 = sphi 0, %s83
      %s87 = sphi 0, %s86
      %s103 = sphi 0, %s87
      %s111 = sphi 0, %s113
      %s114 = sphi 0, %s111
      %s115 = sphi 0, %s114
      %s131 = sphi 0, %s115
    $region4: #{tpu_custom_call.1} parent=1 // loop_header_branch
      %20 = sbr.rel (%p18) target = $region8
    $region5: #{tpu_custom_call.1} parent=1 // loop_body
      %s22 = ssub.s32 %s17, 1
      %s23 = ssub.s32 %s17, 2
      %s30 = sadd.s32 1, %s25
      %p31 = scmp.ge.s32.totalorder %s30, 1
      %s32 = scalar_select %p31, 0, %s30
      %s33 = sadd.s32 1, %s24
      %s34 = scalar_select %p31, %s33, %s24
      %p35 = scmp.ge.s32.totalorder %s34, 2
      %s36 = scalar_select %p35, 0, %s34
      %s38 = sadd.s32 %s37, 1
      %p41 = scmp.eq.s32.totalorder %s17, 1
      %p42 = scmp.ne.s32.totalorder %s37, %s39
      %p43 = scmp.eq.s32.totalorder %s17, 0
      %p44 = por %p42, %p43
      %p45 = scmp.ne.s32.totalorder %s37, %s39
      %p46 = scmp.eq.s32.totalorder %s22, 1
      %p47 = por %p45, %p46
      %p48 = scmp.ne.s32.totalorder %s39, %s40
      %p49 = scmp.eq.s32.totalorder %s22, 0
      %p50 = por %p48, %p49
      %p51 = scmp.ne.s32.totalorder %s39, %s40
      %p52 = scmp.eq.s32.totalorder %s23, 1
      %p53 = por %p51, %p52
      %p55 = scmp.ne.s32.totalorder %s40, %s54
      %p56 = scmp.eq.s32.totalorder %s23, 0
      %p57 = por %p55, %p56
      %s59 = sadd.s32 %s58, 1
      %p62 = scmp.eq.s32.totalorder %s17, 1
      %p63 = scmp.ne.s32.totalorder %s58, %s60
      %p64 = scmp.eq.s32.totalorder %s17, 0
      %p65 = por %p63, %p64
      %p66 = scmp.ne.s32.totalorder %s58, %s60
      %p67 = scmp.eq.s32.totalorder %s22, 1
      %p68 = por %p66, %p67
      %p69 = scmp.ne.s32.totalorder %s60, %s61
      %p70 = scmp.eq.s32.totalorder %s22, 0
      %p71 = por %p69, %p70
      %p72 = scmp.ne.s32.totalorder %s60, %s61
      %p73 = scmp.eq.s32.totalorder %s23, 1
      %p74 = por %p72, %p73
      %p76 = scmp.ne.s32.totalorder %s61, %s75
      %p77 = scmp.eq.s32.totalorder %s23, 0
      %p78 = por %p76, %p77
      %s79 = ssub.s32 %s24, %s36
      %s80 = ssub.s32 %s25, %s32
      %s81 = sor.u32 %s79, %s80
      %p82 = scmp.eq.s32.totalorder %s81, 0
      %s84 = sadd.s32 %s83, 1
      %s85 = scalar_select %p82, %s83, %s84
      %p88 = pneg %p82
      %p89 = scmp.eq.s32.totalorder %s17, 1
      %p90 = por %p88, %p89
      %p91 = scmp.ne.s32.totalorder %s83, %s86
      %p92 = scmp.eq.s32.totalorder %s17, 0
      %p93 = por %p91, %p92
      %p94 = scmp.ne.s32.totalorder %s83, %s86
      %p95 = scmp.eq.s32.totalorder %s22, 1
      %p96 = por %p94, %p95
      %p97 = scmp.ne.s32.totalorder %s86, %s87
      %p98 = scmp.eq.s32.totalorder %s22, 0
      %p99 = por %p97, %p98
      %p100 = scmp.ne.s32.totalorder %s86, %s87
      %p101 = scmp.eq.s32.totalorder %s23, 1
      %p102 = por %p100, %p101
      %p104 = scmp.ne.s32.totalorder %s87, %s103
      %p105 = scmp.eq.s32.totalorder %s23, 0
      %p106 = por %p104, %p105
      %s107 = ssub.s32 %s24, %s36
      %s108 = ssub.s32 %s25, %s32
      %s109 = sor.u32 %s107, %s108
      %p110 = scmp.eq.s32.totalorder %s109, 0
      %s112 = sadd.s32 %s111, 1
      %s113 = scalar_select %p110, %s111, %s112
      %p116 = pneg %p110
      %p117 = scmp.eq.s32.totalorder %s17, 1
      %p118 = por %p116, %p117
      %p119 = scmp.ne.s32.totalorder %s111, %s114
      %p120 = scmp.eq.s32.totalorder %s17, 0
      %p121 = por %p119, %p120
      %p122 = scmp.ne.s32.totalorder %s111, %s114
      %p123 = scmp.eq.s32.totalorder %s22, 1
      %p124 = por %p122, %p123
      %p125 = scmp.ne.s32.totalorder %s114, %s115
      %p126 = scmp.eq.s32.totalorder %s22, 0
      %p127 = por %p125, %p126
      %p128 = scmp.ne.s32.totalorder %s114, %s115
      %p129 = scmp.eq.s32.totalorder %s23, 1
      %p130 = por %p128, %p129
      %p132 = scmp.ne.s32.totalorder %s115, %s131
      %p133 = scmp.eq.s32.totalorder %s23, 0
      %p134 = por %p132, %p133
      %p135 = scmp.le.s32.totalorder 1, %s17
      %p136 = scmp.lt.s32.totalorder %s17, 3
      %p137 = pnand %p135, %p136
      %p138 = pneg %p137
      // Predicated region
      $region9: #{tpu_custom_call.1} parent=5 // pred_check
        _
      $region10: #{tpu_custom_call.1} parent=5 // pred_check_branch
        %140 = sbr.rel (%p137) target = $region12
      $region11: #{tpu_custom_call.1} parent=5 // pred_region
        %s141 = ssub.s32 %s17, 1
        // Predicated region
        $region13: #{tpu_custom_call.1} parent=11 // pred_check
          %p142 = pneg %p50
        $region14: #{tpu_custom_call.1} parent=11 // pred_check_branch
          %144 = sbr.rel (%p142) target = $region16
        $region15: #{tpu_custom_call.1} parent=11 // pred_region
          %s146 = ssub.s32 16, 16
          %147 = vsyncadd [#allocation6], %s146
          %s149 = sshll.u32 %s0, 4
          %s150 = int_to_ptr.vmem [resolvable:$true] %s149
          %152 = dma.vmem_to_smem %s150, 16, [#allocation3], [#allocation6]
        $region16: #{tpu_custom_call.1} parent=11 // pred_fallthru
          _
        // Predicated region
        $region17: #{tpu_custom_call.1} parent=11 // pred_check
          %p153 = pneg %p71
        $region18: #{tpu_custom_call.1} parent=11 // pred_check_branch
          %155 = sbr.rel (%p153) target = $region20
        $region19: #{tpu_custom_call.1} parent=11 // pred_region
          _
        $region20: #{tpu_custom_call.1} parent=11 // pred_fallthru
          _
      $region12: #{tpu_custom_call.1} parent=5 // pred_fallthru
        _
      %p156 = scmp.lt.s32.totalorder %s17, 2
      // Predicated region
      $region21: #{tpu_custom_call.1} parent=5 // pred_check
        %p157 = pneg %p156
      $region22: #{tpu_custom_call.1} parent=5 // pred_check_branch
        %159 = sbr.rel (%p157) target = $region24
      $region23: #{tpu_custom_call.1} parent=5 // pred_region
        // Predicated region
        $region25: #{tpu_custom_call.1} parent=23 // pred_check
          %p160 = pneg %p93
        $region26: #{tpu_custom_call.1} parent=23 // pred_check_branch
          %162 = sbr.rel (%p160) target = $region28
        $region27: #{tpu_custom_call.1} parent=23 // pred_region
          %s163 = sand.u32 %s83, 1
          %s164 = scalar_lea.sflag [#allocation4], %s163
          %s165 = sand.u32 %s83, 1
          %s166 = smul.addr %s165, 64
          %s167 = scalar_lea.vmem [#allocation7], %s166
          %s169 = ssub.s32 1024, 1024
          %170 = vsyncadd %s164, %s169
          %s171 = smul.addr %s25, 2
          %s172 = smul.addr %s24, 8
          %s173 = sadd.s32 %s171, %s172
          %s174 = smul.addr %s173, 128
          %s175 = scalar_lea.hbm %s2, %s174
          %s176 = sshll.u32 %s167, 4
          %s177 = int_to_ptr.vmem [resolvable:$true] %s176
          %182 = dma.hbm_to_vmem [thread:$0]  %s175, 1024, %s177, %s164, 256, 256, 16
        $region28: #{tpu_custom_call.1} parent=23 // pred_fallthru
          _
      $region24: #{tpu_custom_call.1} parent=5 // pred_fallthru
        _
      %p183 = scmp.le.s32.totalorder 1, %s17
      %p184 = scmp.lt.s32.totalorder %s17, 3
      %p185 = pnand %p183, %p184
      %p186 = pneg %p185
      // Predicated region
      $region29: #{tpu_custom_call.1} parent=5 // pred_check
        _
      $region30: #{tpu_custom_call.1} parent=5 // pred_check_branch
        %188 = sbr.rel (%p185) target = $region32
      $region31: #{tpu_custom_call.1} parent=5 // pred_region
        %s189 = ssub.s32 %s17, 1
        // Predicated region
        $region33: #{tpu_custom_call.1} parent=31 // pred_check
          %p190 = pneg %p50
        $region34: #{tpu_custom_call.1} parent=31 // pred_check_branch
          %192 = sbr.rel (%p190) target = $region36
        $region35: #{tpu_custom_call.1} parent=31 // pred_region
          %193 = dma.done [#allocation6], 16
        $region36: #{tpu_custom_call.1} parent=31 // pred_fallthru
          _
        %s194 = sand.u32 %s86, 1
        %s195 = scalar_lea.sflag [#allocation4], %s194
        %s196 = sand.u32 %s86, 1
        %s197 = smul.addr %s196, 64
        %s198 = scalar_lea.vmem [#allocation7], %s197
        // Predicated region
        $region37: #{tpu_custom_call.1} parent=31 // pred_check
          %p199 = pneg %p99
        $region38: #{tpu_custom_call.1} parent=31 // pred_check_branch
          %201 = sbr.rel (%p199) target = $region40
        $region39: #{tpu_custom_call.1} parent=31 // pred_region
          %202 = dma.done %s195, 1024
        $region40: #{tpu_custom_call.1} parent=31 // pred_fallthru
          _
        %203 = sfence
        %p204 = pneg %p50
        %p205 = pneg %p47
        %p206 = pneg %p71
        %p207 = pneg %p68
        %s208 = sand.u32 %s86, 1
        %s209 = scalar_lea.sflag [#allocation4], %s208
        %s210 = sand.u32 %s86, 1
        %s211 = smul.addr %s210, 64
        %s212 = scalar_lea.vmem [#allocation7], %s211
        %p213 = pneg %p99
        %p214 = pneg %p96
        %p215 = pneg %p127
        %p216 = pneg %p124
        %s217 = sand.u32 %s114, 1
        %s218 = scalar_lea.sflag [#allocation5], %s217
        %s219 = sand.u32 %s114, 1
        %s220 = smul.addr %s219, 4
        %s221 = scalar_lea.vmem [#allocation8], %s220
        %s224 = sld [smem:[#allocation2]]
        %v225 = vstv %s224
        %s226 = sld [smem:[#allocation3]]
        %v227 = vld [vmem:[%s198] sm:$0xff]
        %v228 = vld [vmem:[%s198 + $0x8] sm:$0xff]
        %v229 = vstv %s226
        %v230 = vmul.f32 %v229, %v227
        %v231 = vmul.f32 %v229, %v228
        %v232 = vadd.f32 %v225, %v230
        %v233 = vadd.f32 %v225, %v231
        %s234 = sld [smem:[#allocation3 + $0x1]]
        %s235 = scalar_lea.vmem %s198, 16 [#allocation7]
        %v236 = vld [vmem:[%s235] sm:$0xff]
        %v237 = vld [vmem:[%s235 + $0x8] sm:$0xff]
        %v238 = vstv %s234
        %v239 = vmul.f32 %v238, %v236
        %v240 = vmul.f32 %v238, %v237
        %v241 = vadd.f32 %v232, %v239
        %v242 = vadd.f32 %v233, %v240
        %s243 = sld [smem:[#allocation3 + $0x2]]
        %s244 = scalar_lea.vmem %s198, 32 [#allocation7]
        %v245 = vld [vmem:[%s244] sm:$0xff]
        %v246 = vld [vmem:[%s244 + $0x8] sm:$0xff]
        %v247 = vstv %s243
        %v248 = vmul.f32 %v247, %v245
        %v249 = vmul.f32 %v247, %v246
        %v250 = vadd.f32 %v241, %v248
        %v251 = vadd.f32 %v242, %v249
        %s252 = sld [smem:[#allocation3 + $0x3]]
        %s253 = scalar_lea.vmem %s198, 48 [#allocation7]
        %v254 = vld [vmem:[%s253] sm:$0xff]
        %v255 = vld [vmem:[%s253 + $0x8] sm:$0xff]
        %v256 = vstv %s252
        %v257 = vmul.f32 %v256, %v254
        %v258 = vmul.f32 %v256, %v255
        %v259 = vadd.f32 %v250, %v257
        %v260 = vadd.f32 %v251, %v258
        %vm261 = vcmp.le.f32.partialorder %v259, 0.8672928
        %vm262 = vcmp.le.f32.partialorder %v260, 0.8672928
        %vm263 = vmpackc.low %vm261, %vm261
        %vm264 = vmpackc.even %vm263, %vm263
        %vm265 = vmpackc.low %vm262, %vm262
        %vm266 = vmpackc.even %vm265, %vm265
        %v267 = vsel %vm264, 16843009, 0
        %v268 = vsel %vm266, 16843009, 0
        %v269 = vunpack.c.0.s8 %v267
        %v270 = vunpack.c.0.s8 %v268
        %v271 = vpack.c.b16 %v270, %v269
        %v272 = vpack.c.b8 %v271, %v271
        %273 = vst [vmem:[%s221] sm:$0xf] %v272
        %s274 = sand.u32 %s114, 1
        %s275 = scalar_lea.sflag [#allocation5], %s274
        %s276 = sand.u32 %s114, 1
        %s277 = smul.addr %s276, 4
        %s278 = scalar_lea.vmem [#allocation8], %s277
        // Predicated region
        $region41: #{tpu_custom_call.1} parent=31 // pred_check
          %p279 = pneg %p124
        $region42: #{tpu_custom_call.1} parent=31 // pred_check_branch
          %281 = sbr.rel (%p279) target = $region44
        $region43: #{tpu_custom_call.1} parent=31 // pred_region
          %s283 = ssub.s32 64, 64
          %284 = vsyncadd %s275, %s283
          %s285 = smul.addr %s27, 2
          %s286 = smul.addr %s26, 2
          %s287 = sadd.s32 %s285, %s286
          %s288 = smul.addr %s287, 32
          %s289 = scalar_lea.hbm %s3, %s288
          %s291 = sshll.u32 %s278, 4
          %s292 = int_to_ptr.vmem [resolvable:$true] %s291
          %294 = dma.vmem_to_hbm [thread:$0]  %s292, 64, %s289, %s275
        $region44: #{tpu_custom_call.1} parent=31 // pred_fallthru
          _
      $region32: #{tpu_custom_call.1} parent=5 // pred_fallthru
        _
      %p295 = scmp.le.s32.totalorder 2, %s17
      // Predicated region
      $region45: #{tpu_custom_call.1} parent=5 // pred_check
        %p296 = pneg %p295
      $region46: #{tpu_custom_call.1} parent=5 // pred_check_branch
        %298 = sbr.rel (%p296) target = $region48
      $region47: #{tpu_custom_call.1} parent=5 // pred_region
        %s299 = ssub.s32 %s17, 2
        // Predicated region
        $region49: #{tpu_custom_call.1} parent=47 // pred_check
          %p300 = pneg %p130
        $region50: #{tpu_custom_call.1} parent=47 // pred_check_branch
          %302 = sbr.rel (%p300) target = $region52
        $region51: #{tpu_custom_call.1} parent=47 // pred_region
          %s303 = sand.u32 %s115, 1
          %s304 = scalar_lea.sflag [#allocation5], %s303
          %s305 = sand.u32 %s115, 1
          %s306 = smul.addr %s305, 4
          %s307 = scalar_lea.vmem [#allocation8], %s306
          %308 = dma.done %s304, 64
        $region52: #{tpu_custom_call.1} parent=47 // pred_fallthru
          _
      $region48: #{tpu_custom_call.1} parent=5 // pred_fallthru
        _
    $region6: #{tpu_custom_call.1} parent=1 // loop_footer
      %s21 = sadd.s32 1, %s17
    $region7: #{tpu_custom_call.1} parent=1 // loop_footer_branch
      %16 = sbr.rel target = $region3
    $region8: #{tpu_custom_call.1} parent=1 // loop_exit
      _
    %309 = vsyncpa [#allocation4], 1
    %s310 = scalar_lea.sflag [#allocation4], 1
    %311 = vsyncpa %s310, 1
    %312 = vsyncpa [#allocation5], 1
    %s313 = scalar_lea.sflag [#allocation5], 1
    %314 = vsyncpa %s313, 1
    %315 = vsyncpa [#allocation6], 1
    %s316 = scalar_lea.sflag [#allocation6], 1
    %317 = vsyncpa %s316, 1

</llo_original>
